<compile_context>
chip_gen: v7x
topology: tpu7x:2x2x1
jax: 0.10.0
libtpu: 0.0.40
codegen_flags: <defaults>
</compile_context>

<pallas_src>
import functools

import jax
import jax.numpy as jnp
from jax.experimental import pallas as pl
from jax.experimental.pallas import tpu as pltpu

EPS = 1e-5


def _round_up(n, m):
    return (n + m - 1) // m * m


def _mlp_shallow_kernel(x_ref, w1_ref, gamma_ref, beta_ref, w2_ref, b2_ref,
                        out_ref, acc_ref, *, b_real):
    """One K tile of Linear1; the last tile fuses BN(train) + ReLU + Linear2."""
    k = pl.program_id(0)

    @pl.when(k == 0)
    def _():
        acc_ref[...] = jnp.zeros_like(acc_ref)

    # Linear1 partial product: bf16 operands, f32 MXU accumulation.  x may arrive
    # as f32 (aligned, no wrapper copy) or as pre-padded bf16; the cast is a cheap
    # VPU op hidden under the DMA/MXU.
    acc_ref[...] += jnp.dot(x_ref[...].astype(jnp.bfloat16), w1_ref[...],
                            preferred_element_type=jnp.float32)

    @pl.when(k == pl.num_programs(0) - 1)
    def _():
        h = acc_ref[...]                                    # (B_pad, H_pad) f32
        inv_b = 1.0 / float(b_real)

        # Padded batch rows of h are exactly zero (zero x rows, Linear1 bias
        # dropped), so plain column sums already exclude them; divide by the
        # TRUE batch size.  var via E[h^2] - mean^2 (no mask, no hc temporary).
        mean = jnp.sum(h, axis=0, keepdims=True) * inv_b
        var = jnp.sum(h * h, axis=0, keepdims=True) * inv_b - mean * mean

        scale = gamma_ref[...] * jax.lax.rsqrt(var + EPS)   # folded BN scale
        shift = beta_ref[...] - mean * scale                # folded BN shift
        a = jnp.maximum(h * scale + shift, 0.0)             # BN affine + ReLU

        out = jnp.dot(a.astype(jnp.bfloat16), w2_ref[...],
                      preferred_element_type=jnp.float32) + b2_ref[...]
        out_ref[...] = out.astype(out_ref.dtype)


def prepare_params(params):
    """Pad / bf16-cast the weights ONCE (call at init, not per forward)."""
    w1, b1, gamma, beta, w2, b2 = params
    del b1  # cancelled exactly by training-mode BatchNorm mean subtraction
    D, Hid = w1.shape
    C = w2.shape[1]
    D_pad, H_pad, C_pad = _round_up(D, 128), _round_up(Hid, 128), _round_up(C, 128)
    f32, bf16 = jnp.float32, jnp.bfloat16
    w1p = jnp.zeros((D_pad, H_pad), bf16).at[:D, :Hid].set(w1.astype(bf16))
    gp = jnp.zeros((1, H_pad), f32).at[:, :Hid].set(gamma.reshape(1, Hid))
    bp = jnp.zeros((1, H_pad), f32).at[:, :Hid].set(beta.reshape(1, Hid))
    w2p = jnp.zeros((H_pad, C_pad), bf16).at[:Hid, :C].set(w2.astype(bf16))
    b2p = jnp.zeros((1, C_pad), f32).at[:, :C].set(b2.reshape(1, C))
    meta = dict(D=D, Hid=Hid, C=C)
    return (w1p, gp, bp, w2p, b2p), meta


def mlp_shallow_forward(x_nchw, prepped, meta, *, tk_max=2048):
    """x_nchw: (B, C, H, W) float32. Returns (B, classes) float32."""
    w1p, gp, bp, w2p, b2p = prepped
    D, Hid, C = meta["D"], meta["Hid"], meta["C"]
    D_pad, H_pad = w1p.shape
    C_pad = w2p.shape[1]

    B = x_nchw.shape[0]
    x_flat = x_nchw.reshape(B, -1)       # same memory order as torch .view(B, -1)

    # K tiling: D padded only to 128; tk must divide D_pad. Small D -> one block.
    if D_pad <= tk_max:
        tk = D_pad
    else:
        tk = next(c for c in (2048, 1024, 512, 256, 128)
                  if c <= tk_max and D_pad % c == 0)
    k_tiles = D_pad // tk

    # x: skip the wrapper copy entirely when already aligned (kernel casts
    # f32 -> bf16); otherwise pad once per call, writing the smaller bf16 dtype.
    if B % 16 == 0 and D == D_pad:
        xp, B_pad = x_flat, B
    else:
        B_pad = _round_up(max(B, 16), 16)   # 16 rows: native bf16 (16,128) packing
        xp = (jnp.zeros((B_pad, D_pad), jnp.bfloat16)
              .at[:B, :D].set(x_flat.astype(jnp.bfloat16)))

    kernel = functools.partial(_mlp_shallow_kernel, b_real=B)

    # Deeper input pipeline on the streamed operands only when there are enough
    # K steps to overlap.
    if k_tiles > 2:
        x_spec = pl.BlockSpec((B_pad, tk), lambda k: (0, k),
                              pipeline_mode=pl.Buffered(3))
        w1_spec = pl.BlockSpec((tk, H_pad), lambda k: (k, 0),
                               pipeline_mode=pl.Buffered(3))
    else:
        x_spec = pl.BlockSpec((B_pad, tk), lambda k: (0, k))
        w1_spec = pl.BlockSpec((tk, H_pad), lambda k: (k, 0))

    # Explicit VMEM budget so the same tiling stays safe on v7x (64 MiB core).
    x_elt = 2 if xp.dtype == jnp.bfloat16 else 4
    depth = 3 if k_tiles > 2 else 2
    vmem_needed = (depth * (B_pad * tk * x_elt + tk * H_pad * 2)
                   + H_pad * C_pad * 2 + B_pad * H_pad * 4
                   + 2 * B_pad * C_pad * 4 + 4 * H_pad * 4)
    vmem_limit = int(min(max(2 * vmem_needed, 4 << 20), 32 << 20))

    flops = 2 * B * D * Hid + 2 * B * Hid * C
    bytes_accessed = (xp.size * x_elt + w1p.size * 2 + w2p.size * 2
                      + (gp.size + bp.size + b2p.size) * 4 + B_pad * C_pad * 4)

    out_padded = pl.pallas_call(
        kernel,
        out_shape=jax.ShapeDtypeStruct((B_pad, C_pad), jnp.float32),
        grid=(k_tiles,),
        in_specs=[
            x_spec,                                          # x : streamed over K
            w1_spec,                                         # w1: streamed over K
            pl.BlockSpec((1, H_pad), lambda k: (0, 0)),      # gamma (resident)
            pl.BlockSpec((1, H_pad), lambda k: (0, 0)),      # beta  (resident)
            pl.BlockSpec((H_pad, C_pad), lambda k: (0, 0)),  # w2    (resident)
            pl.BlockSpec((1, C_pad), lambda k: (0, 0)),      # b2    (resident)
        ],
        out_specs=pl.BlockSpec((B_pad, C_pad), lambda k: (0, 0)),
        scratch_shapes=[pltpu.VMEM((B_pad, H_pad), jnp.float32)],
        compiler_params=pltpu.CompilerParams(
            dimension_semantics=("arbitrary",),
            vmem_limit_bytes=vmem_limit),
        cost_estimate=pl.CostEstimate(flops=flops, transcendentals=Hid,
                                      bytes_accessed=bytes_accessed),
    )(xp, w1p, gp, bp, w2p, b2p)

    return out_padded[:B, :C]


def init_params(key, channel, width, height, classes, hidden=100):
    """Deterministic init mimicking PyTorch Linear (uniform +-1/sqrt(fan_in)),
    BatchNorm gamma=1, beta=0. Weights stored as (in, out) = Linear weight^T."""
    d_in = channel * width * height
    k1, k2, k3, k4 = jax.random.split(key, 4)
    lim1 = 1.0 / jnp.sqrt(d_in)
    lim2 = 1.0 / jnp.sqrt(hidden)
    w1 = jax.random.uniform(k1, (d_in, hidden), jnp.float32, -lim1, lim1)
    b1 = jax.random.uniform(k2, (1, hidden), jnp.float32, -lim1, lim1)
    gamma = jnp.ones((1, hidden), jnp.float32)
    beta = jnp.zeros((1, hidden), jnp.float32)
    w2 = jax.random.uniform(k3, (hidden, classes), jnp.float32, -lim2, lim2)
    b2 = jax.random.uniform(k4, (1, classes), jnp.float32, -lim2, lim2)
    return (w1, b1, gamma, beta, w2, b2)


if __name__ == "__main__":
    B, C, H, W, CLASSES = 2, 4, 16, 16, 10

    key = jax.random.PRNGKey(0)
    kx, kp = jax.random.split(key)
    x = jax.random.normal(kx, (B, C, H, W), jnp.float32)
    params = init_params(kp, C, W, H, CLASSES)

    # Pad / cast weights ONCE; the jit'd forward closes over the padded arrays
    # so no per-call weight padding / casting HBM traffic remains.
    prepped, meta = prepare_params(params)
    fwd = jax.jit(lambda xb: mlp_shallow_forward(xb, prepped, meta))

    out = jax.block_until_ready(fwd(x))

    # Reference mirroring the kernel's precision choices (bf16 matmul operands,
    # f32 accumulation / BN math).  Linear1 bias is included here: training-mode
    # BatchNorm cancels it, so the result matches the bias-free kernel path.
    # NOTE: B == 1 would give var = 0 (PyTorch refuses training-mode BN at B=1).
    w1, b1, gamma, beta, w2, b2 = params
    xf = x.reshape(B, -1)
    hr = jnp.dot(xf.astype(jnp.bfloat16), w1.astype(jnp.bfloat16),
                 preferred_element_type=jnp.float32) + b1
    m = hr.mean(0, keepdims=True)
    v = ((hr - m) ** 2).mean(0, keepdims=True)
    ar = jnp.maximum((hr - m) * jax.lax.rsqrt(v + EPS) * gamma + beta, 0.0)
    ref = jnp.dot(ar.astype(jnp.bfloat16), w2.astype(jnp.bfloat16),
                  preferred_element_type=jnp.float32) + b2

    assert out.shape == (B, CLASSES)
    assert jnp.allclose(out, ref, atol=5e-3, rtol=5e-3)

    print("KERNEL_OK")
</pallas_src>

<mosaic_0001>
module attributes {stable_mosaic.version = 11 : i64} {
  func.func @_mlp_shallow_kernel(%arg0: i32, %arg1: memref<16x1024xbf16, #tpu.memory_space<vmem>>, %arg2: memref<1024x128xbf16, #tpu.memory_space<vmem>>, %arg3: memref<1x128xf32, #tpu.memory_space<vmem>>, %arg4: memref<1x128xf32, #tpu.memory_space<vmem>>, %arg5: memref<128x128xbf16, #tpu.memory_space<vmem>>, %arg6: memref<1x128xf32, #tpu.memory_space<vmem>>, %arg7: memref<16x128xf32, #tpu.memory_space<vmem>>, %arg8: memref<16x128xf32, #tpu.memory_space<vmem>>) attributes {dimension_semantics = [#tpu.dimension_semantics<arbitrary>], iteration_bounds = array<i64: 1>, scalar_prefetch = 0 : i64, scratch_operands = 1 : i64, tpu.core_type = #tpu.core_type<tc>, window_params = [{transform_indices = @transform_0, window_bounds = array<i64: 16, 1024>}, {transform_indices = @transform_1, window_bounds = array<i64: 1024, 128>}, {pipeline_mode = #tpu.pipeline_mode<synchronous>, transform_indices = @transform_2, window_bounds = array<i64: 1, 128>}, {pipeline_mode = #tpu.pipeline_mode<synchronous>, transform_indices = @transform_3, window_bounds = array<i64: 1, 128>}, {pipeline_mode = #tpu.pipeline_mode<synchronous>, transform_indices = @transform_4, window_bounds = array<i64: 128, 128>}, {pipeline_mode = #tpu.pipeline_mode<synchronous>, transform_indices = @transform_5, window_bounds = array<i64: 1, 128>}, {pipeline_mode = #tpu.pipeline_mode<synchronous>, transform_indices = @transform_6, window_bounds = array<i64: 16, 128>}]} {
    %c0_i32 = arith.constant 0 : i32
    %0 = arith.cmpi eq, %arg0, %c0_i32 : i32
    %1 = arith.extui %0 : i1 to i32
    %c0_i32_0 = arith.constant 0 : i32
    %2 = arith.cmpi ne, %1, %c0_i32_0 : i32
    scf.if %2 {
      %cst_10 = arith.constant 0.000000e+00 : f32
      %12 = vector.broadcast %cst_10 : f32 to vector<16x128xf32>
      %c0_11 = arith.constant 0 : index
      %c0_12 = arith.constant 0 : index
      %13 = vector.load %arg8[%c0_11, %c0_12] : memref<16x128xf32, #tpu.memory_space<vmem>>, vector<16x128xf32>
      tpu.vector_store %arg8[%c0_11, %c0_12], %12 {strides = array<i32>} : memref<16x128xf32, #tpu.memory_space<vmem>>, vector<16x128xf32>,
    } else {
    }
    %c0 = arith.constant 0 : index
    %c0_1 = arith.constant 0 : index
    %3 = vector.load %arg8[%c0, %c0_1] : memref<16x128xf32, #tpu.memory_space<vmem>>, vector<16x128xf32>
    %c0_2 = arith.constant 0 : index
    %c0_3 = arith.constant 0 : index
    %4 = vector.load %arg1[%c0_2, %c0_3] : memref<16x1024xbf16, #tpu.memory_space<vmem>>, vector<16x1024xbf16>
    %c0_4 = arith.constant 0 : index
    %c0_5 = arith.constant 0 : index
    %5 = vector.load %arg2[%c0_4, %c0_5] : memref<1024x128xbf16, #tpu.memory_space<vmem>>, vector<1024x128xbf16>
    %cst = arith.constant dense<0.000000e+00> : vector<16x128xf32>
    %6 = tpu.matmul %4, %5, %cst {dimension_numbers = #tpu.dot_dimension_numbers<[1], [0], [0], [1], [0, 0, 1, 1], [], []>} : vector<16x1024xbf16>, vector<1024x128xbf16>, vector<16x128xf32> -> vector<16x128xf32>
    %7 = arith.addf %3, %6 : vector<16x128xf32>
    %c0_6 = arith.constant 0 : index
    %c0_7 = arith.constant 0 : index
    %8 = vector.load %arg8[%c0_6, %c0_7] : memref<16x128xf32, #tpu.memory_space<vmem>>, vector<16x128xf32>
    tpu.vector_store %arg8[%c0_6, %c0_7], %7 {strides = array<i32>} : memref<16x128xf32, #tpu.memory_space<vmem>>, vector<16x128xf32>,
    %c0_i32_8 = arith.constant 0 : i32
    %9 = arith.cmpi eq, %arg0, %c0_i32_8 : i32
    %10 = arith.extui %9 : i1 to i32
    %c0_i32_9 = arith.constant 0 : i32
    %11 = arith.cmpi ne, %10, %c0_i32_9 : i32
    scf.if %11 {
      %c0_10 = arith.constant 0 : index
      %c0_11 = arith.constant 0 : index
      %12 = vector.load %arg8[%c0_10, %c0_11] : memref<16x128xf32, #tpu.memory_space<vmem>>, vector<16x128xf32>
      %cst_12 = arith.constant dense<0.000000e+00> : vector<128xf32>
      %13 = vector.multi_reduction <add>, %12, %cst_12 [0] : vector<16x128xf32> to vector<128xf32>
      %14 = vector.shape_cast %13 : vector<128xf32> to vector<1x128xf32>
      %cst_13 = arith.constant 5.000000e-01 : f32
      %15 = vector.broadcast %cst_13 : f32 to vector<1x128xf32>
      %16 = arith.mulf %14, %15 : vector<1x128xf32>
      %17 = arith.mulf %12, %12 : vector<16x128xf32>
      %cst_14 = arith.constant dense<0.000000e+00> : vector<128xf32>
      %18 = vector.multi_reduction <add>, %17, %cst_14 [0] : vector<16x128xf32> to vector<128xf32>
      %19 = vector.shape_cast %18 : vector<128xf32> to vector<1x128xf32>
      %cst_15 = arith.constant 5.000000e-01 : f32
      %20 = vector.broadcast %cst_15 : f32 to vector<1x128xf32>
      %21 = arith.mulf %19, %20 : vector<1x128xf32>
      %22 = arith.mulf %16, %16 : vector<1x128xf32>
      %23 = arith.subf %21, %22 : vector<1x128xf32>
      %c0_16 = arith.constant 0 : index
      %c0_17 = arith.constant 0 : index
      %24 = vector.load %arg3[%c0_16, %c0_17] : memref<1x128xf32, #tpu.memory_space<vmem>>, vector<1x128xf32>
      %cst_18 = arith.constant 9.99999974E-6 : f32
      %25 = vector.broadcast %cst_18 : f32 to vector<1x128xf32>
      %26 = arith.addf %23, %25 : vector<1x128xf32>
      %27 = math.rsqrt %26 : vector<1x128xf32>
      %28 = arith.mulf %24, %27 : vector<1x128xf32>
      %c0_19 = arith.constant 0 : index
      %c0_20 = arith.constant 0 : index
      %29 = vector.load %arg4[%c0_19, %c0_20] : memref<1x128xf32, #tpu.memory_space<vmem>>, vector<1x128xf32>
      %30 = arith.mulf %16, %28 : vector<1x128xf32>
      %31 = arith.subf %29, %30 : vector<1x128xf32>
      %32 = vector.broadcast %28 : vector<1x128xf32> to vector<16x128xf32>
      %33 = arith.mulf %12, %32 : vector<16x128xf32>
      %34 = vector.broadcast %31 : vector<1x128xf32> to vector<16x128xf32>
      %35 = arith.addf %33, %34 : vector<16x128xf32>
      %cst_21 = arith.constant 0.000000e+00 : f32
      %36 = vector.broadcast %cst_21 : f32 to vector<16x128xf32>
      %37 = arith.maximumf %35, %36 : vector<16x128xf32>
      %38 = arith.truncf %37 : vector<16x128xf32> to vector<16x128xbf16>
      %c0_22 = arith.constant 0 : index
      %c0_23 = arith.constant 0 : index
      %39 = vector.load %arg5[%c0_22, %c0_23] : memref<128x128xbf16, #tpu.memory_space<vmem>>, vector<128x128xbf16>
      %cst_24 = arith.constant dense<0.000000e+00> : vector<16x128xf32>
      %40 = tpu.matmul %38, %39, %cst_24 {dimension_numbers = #tpu.dot_dimension_numbers<[1], [0], [0], [1], [0, 0, 1, 1], [], []>} : vector<16x128xbf16>, vector<128x128xbf16>, vector<16x128xf32> -> vector<16x128xf32>
      %c0_25 = arith.constant 0 : index
      %c0_26 = arith.constant 0 : index
      %41 = vector.load %arg6[%c0_25, %c0_26] : memref<1x128xf32, #tpu.memory_space<vmem>>, vector<1x128xf32>
      %42 = vector.broadcast %41 : vector<1x128xf32> to vector<16x128xf32>
      %43 = arith.addf %40, %42 : vector<16x128xf32>
      %c0_27 = arith.constant 0 : index
      %c0_28 = arith.constant 0 : index
      %44 = vector.load %arg7[%c0_27, %c0_28] : memref<16x128xf32, #tpu.memory_space<vmem>>, vector<16x128xf32>
      tpu.vector_store %arg7[%c0_27, %c0_28], %43 {strides = array<i32>} : memref<16x128xf32, #tpu.memory_space<vmem>>, vector<16x128xf32>,
    } else {
    }
    return
  }
  func.func @transform_0(%arg0: i32) -> (i32, i32) {
    %c0_i32 = arith.constant 0 : i32
    %c0_i32_0 = arith.constant 0 : i32
    return %c0_i32, %arg0 : i32, i32
  }
  func.func @transform_1(%arg0: i32) -> (i32, i32) {
    %c0_i32 = arith.constant 0 : i32
    %c0_i32_0 = arith.constant 0 : i32
    return %arg0, %c0_i32 : i32, i32
  }
  func.func @transform_2(%arg0: i32) -> (i32, i32) {
    %c0_i32 = arith.constant 0 : i32
    %c0_i32_0 = arith.constant 0 : i32
    %c0_i32_1 = arith.constant 0 : i32
    return %c0_i32, %c0_i32_0 : i32, i32
  }
  func.func @transform_3(%arg0: i32) -> (i32, i32) {
    %c0_i32 = arith.constant 0 : i32
    %c0_i32_0 = arith.constant 0 : i32
    %c0_i32_1 = arith.constant 0 : i32
    return %c0_i32, %c0_i32_0 : i32, i32
  }
  func.func @transform_4(%arg0: i32) -> (i32, i32) {
    %c0_i32 = arith.constant 0 : i32
    %c0_i32_0 = arith.constant 0 : i32
    %c0_i32_1 = arith.constant 0 : i32
    return %c0_i32, %c0_i32_0 : i32, i32
  }
  func.func @transform_5(%arg0: i32) -> (i32, i32) {
    %c0_i32 = arith.constant 0 : i32
    %c0_i32_0 = arith.constant 0 : i32
    %c0_i32_1 = arith.constant 0 : i32
    return %c0_i32, %c0_i32_0 : i32, i32
  }
  func.func @transform_6(%arg0: i32) -> (i32, i32) {
    %c0_i32 = arith.constant 0 : i32
    %c0_i32_0 = arith.constant 0 : i32
    %c0_i32_1 = arith.constant 0 : i32
    return %c0_i32, %c0_i32_0 : i32, i32
  }
}

</mosaic_0001>

<llo_original>
// kernel: _lambda_.1
$region0: #{_lambda_.1}
  #allocation0 [shape = 'u32[]', space=smem, size = 0x4, offset = 0x4, fixed_abs, tag = 'smem constant byte address 0x4 - core index']
  #allocation1 [shape = 'u32[144,128]{1,0:T(1,128)}', space=vmem, size = 0x12000, scoped, tag = 'internal scratch']
  #allocation2 [shape = 'f32[16,128]{1,0:T(8,128)}', space=vmem, size = 0x2000, scoped, tag = 'scratch operand']
  %s0 = inlined_call_operand.vmem [shape: bf16[16,1024], index: 0, kind: input, shape index: {}]
  %s1 = inlined_call_operand.hbm [shape: bf16[1024,128], index: 1, kind: input, shape index: {}]
  %s2 = inlined_call_operand.vmem [shape: f32[1,128], index: 2, kind: input, shape index: {}]
  %s3 = inlined_call_operand.vmem [shape: f32[1,128], index: 3, kind: input, shape index: {}]
  %s4 = inlined_call_operand.vmem [shape: bf16[128,128], index: 4, kind: input, shape index: {}]
  %s5 = inlined_call_operand.vmem [shape: f32[1,128], index: 5, kind: input, shape index: {}]
  %s6 = inlined_call_operand.vmem [shape: f32[16,128], index: 6, kind: output, shape index: {}]
  %s7 = sld [smem:[#allocation0]]
  $region46: #{_lambda_.1} parent=0
    _
  %s9 = ssub.s32 1, %s7
  %s10 = scalar_select 0, %s9, %s7
  $region1: #{_lambda_.1} parent=0
    #allocation3 [shape = 'u8[262144]{0}', space=vmem, size = 0x40000, scoped, tag = 'input window, operand 1, single buffered']
    #allocation4 [shape = 's32[1]{0}', space=sflag, size = 0x4, scoped, tag = 'scoped memory for _lambda_.1']
    %11 = vsyncpa [#allocation4], 0
    // Predicated region
    $region2: #{_lambda_.1} parent=1 // pred_check
      _
    $region3: #{_lambda_.1} parent=1 // pred_check_branch
      %13 = sbr.rel (0) target = $region5
    $region4: #{_lambda_.1} parent=1 // pred_region
      _
    $region5: #{_lambda_.1} parent=1 // pred_fallthru
      _
    // Predicated region
    $region6: #{_lambda_.1} parent=1 // pred_check
      _
    $region7: #{_lambda_.1} parent=1 // pred_check_branch
      %15 = sbr.rel (0) target = $region9
    $region8: #{_lambda_.1} parent=1 // pred_region
      %s17 = ssub.s32 8192, 8192
      %18 = vsyncadd [#allocation4], %s17
      %s19 = sshll.u32 [#allocation3], 4
      %s20 = int_to_ptr.vmem [resolvable:$true] %s19
      %25 = dma.hbm_to_vmem [thread:$0]  %s1, 8192, %s20, [#allocation4], 64, 64, 4
    $region9: #{_lambda_.1} parent=1 // pred_fallthru
      _
    // Predicated region
    $region10: #{_lambda_.1} parent=1 // pred_check
      _
    $region11: #{_lambda_.1} parent=1 // pred_check_branch
      %27 = sbr.rel (0) target = $region13
    $region12: #{_lambda_.1} parent=1 // pred_region
      _
    $region13: #{_lambda_.1} parent=1 // pred_fallthru
      _
    // Predicated region
    $region14: #{_lambda_.1} parent=1 // pred_check
      _
    $region15: #{_lambda_.1} parent=1 // pred_check_branch
      %29 = sbr.rel (0) target = $region17
    $region16: #{_lambda_.1} parent=1 // pred_region
      _
    $region17: #{_lambda_.1} parent=1 // pred_fallthru
      _
    // Predicated region
    $region18: #{_lambda_.1} parent=1 // pred_check
      _
    $region19: #{_lambda_.1} parent=1 // pred_check_branch
      %31 = sbr.rel (0) target = $region21
    $region20: #{_lambda_.1} parent=1 // pred_region
      _
    $region21: #{_lambda_.1} parent=1 // pred_fallthru
      _
    // Predicated region
    $region22: #{_lambda_.1} parent=1 // pred_check
      _
    $region23: #{_lambda_.1} parent=1 // pred_check_branch
      %33 = sbr.rel (0) target = $region25
    $region24: #{_lambda_.1} parent=1 // pred_region
      _
    $region25: #{_lambda_.1} parent=1 // pred_fallthru
      _
    // Predicated region
    $region26: #{_lambda_.1} parent=1 // pred_check
      _
    $region27: #{_lambda_.1} parent=1 // pred_check_branch
      %35 = sbr.rel (0) target = $region29
    $region28: #{_lambda_.1} parent=1 // pred_region
      %36 = dma.done [#allocation4], 8192
    $region29: #{_lambda_.1} parent=1 // pred_fallthru
      _
    %p38 = scmp.eq.s32.totalorder 0, 0
    // Predicated region
    $region30: #{_lambda_.1} parent=1 // pred_check
      %p39 = pneg %p38
    $region31: #{_lambda_.1} parent=1 // pred_check_branch
      %41 = sbr.rel (%p39) target = $region33
    $region32: #{_lambda_.1} parent=1 // pred_region
      %42 = vst [vmem:[#allocation2] sm:$0xff] 0.0
      %43 = vst [vmem:[#allocation2 + $0x8] sm:$0xff] 0.0
    $region33: #{_lambda_.1} parent=1 // pred_fallthru
      _
    %v44 = vld [vmem:[#allocation2] sm:$0xff]
    %v45 = vld [vmem:[#allocation2 + $0x8] sm:$0xff]
    %v46 = vld [vmem:[%s0] sm:$0xff]
    %v47 = vld [vmem:[%s0 + $0x8] sm:$0xff]
    %v48 = vld [vmem:[%s0 + $0x10] sm:$0xff]
    %v49 = vld [vmem:[%s0 + $0x18] sm:$0xff]
    %v50 = vld [vmem:[%s0 + $0x20] sm:$0xff]
    %v51 = vld [vmem:[%s0 + $0x28] sm:$0xff]
    %v52 = vld [vmem:[%s0 + $0x30] sm:$0xff]
    %v53 = vld [vmem:[%s0 + $0x38] sm:$0xff]
    %v54 = vld [vmem:[#allocation3] sm:$0xf]
    %v55 = vld [vmem:[#allocation3 + $0x4] sm:$0xf]
    %v56 = vld [vmem:[#allocation3 + $0x8] sm:$0xf]
    %v57 = vld [vmem:[#allocation3 + $0xc] sm:$0xf]
    %v58 = vld [vmem:[#allocation3 + $0x10] sm:$0xf]
    %v59 = vld [vmem:[#allocation3 + $0x14] sm:$0xf]
    %v60 = vld [vmem:[#allocation3 + $0x18] sm:$0xf]
    %v61 = vld [vmem:[#allocation3 + $0x1c] sm:$0xf]
    %v62 = vld [vmem:[#allocation3 + $0x20] sm:$0xf]
    %v63 = vld [vmem:[#allocation3 + $0x24] sm:$0xf]
    %v64 = vld [vmem:[#allocation3 + $0x28] sm:$0xf]
    %v65 = vld [vmem:[#allocation3 + $0x2c] sm:$0xf]
    %v66 = vld [vmem:[#allocation3 + $0x30] sm:$0xf]
    %v67 = vld [vmem:[#allocation3 + $0x34] sm:$0xf]
    %v68 = vld [vmem:[#allocation3 + $0x38] sm:$0xf]
    %v69 = vld [vmem:[#allocation3 + $0x3c] sm:$0xf]
    %v70 = vld [vmem:[#allocation3 + $0x40] sm:$0xf]
    %v71 = vld [vmem:[#allocation3 + $0x44] sm:$0xf]
    %v72 = vld [vmem:[#allocation3 + $0x48] sm:$0xf]
    %v73 = vld [vmem:[#allocation3 + $0x4c] sm:$0xf]
    %v74 = vld [vmem:[#allocation3 + $0x50] sm:$0xf]
    %v75 = vld [vmem:[#allocation3 + $0x54] sm:$0xf]
    %v76 = vld [vmem:[#allocation3 + $0x58] sm:$0xf]
    %v77 = vld [vmem:[#allocation3 + $0x5c] sm:$0xf]
    %v78 = vld [vmem:[#allocation3 + $0x60] sm:$0xf]
    %v79 = vld [vmem:[#allocation3 + $0x64] sm:$0xf]
    %v80 = vld [vmem:[#allocation3 + $0x68] sm:$0xf]
    %v81 = vld [vmem:[#allocation3 + $0x6c] sm:$0xf]
    %v82 = vld [vmem:[#allocation3 + $0x70] sm:$0xf]
    %v83 = vld [vmem:[#allocation3 + $0x74] sm:$0xf]
    %v84 = vld [vmem:[#allocation3 + $0x78] sm:$0xf]
    %v85 = vld [vmem:[#allocation3 + $0x7c] sm:$0xf]
    %v86 = vld [vmem:[#allocation3 + $0x80] sm:$0xf]
    %v87 = vld [vmem:[#allocation3 + $0x84] sm:$0xf]
    %v88 = vld [vmem:[#allocation3 + $0x88] sm:$0xf]
    %v89 = vld [vmem:[#allocation3 + $0x8c] sm:$0xf]
    %v90 = vld [vmem:[#allocation3 + $0x90] sm:$0xf]
    %v91 = vld [vmem:[#allocation3 + $0x94] sm:$0xf]
    %v92 = vld [vmem:[#allocation3 + $0x98] sm:$0xf]
    %v93 = vld [vmem:[#allocation3 + $0x9c] sm:$0xf]
    %v94 = vld [vmem:[#allocation3 + $0xa0] sm:$0xf]
    %v95 = vld [vmem:[#allocation3 + $0xa4] sm:$0xf]
    %v96 = vld [vmem:[#allocation3 + $0xa8] sm:$0xf]
    %v97 = vld [vmem:[#allocation3 + $0xac] sm:$0xf]
    %v98 = vld [vmem:[#allocation3 + $0xb0] sm:$0xf]
    %v99 = vld [vmem:[#allocation3 + $0xb4] sm:$0xf]
    %v100 = vld [vmem:[#allocation3 + $0xb8] sm:$0xf]
    %v101 = vld [vmem:[#allocation3 + $0xbc] sm:$0xf]
    %v102 = vld [vmem:[#allocation3 + $0xc0] sm:$0xf]
    %v103 = vld [vmem:[#allocation3 + $0xc4] sm:$0xf]
    %v104 = vld [vmem:[#allocation3 + $0xc8] sm:$0xf]
    %v105 = vld [vmem:[#allocation3 + $0xcc] sm:$0xf]
    %v106 = vld [vmem:[#allocation3 + $0xd0] sm:$0xf]
    %v107 = vld [vmem:[#allocation3 + $0xd4] sm:$0xf]
    %v108 = vld [vmem:[#allocation3 + $0xd8] sm:$0xf]
    %v109 = vld [vmem:[#allocation3 + $0xdc] sm:$0xf]
    %v110 = vld [vmem:[#allocation3 + $0xe0] sm:$0xf]
    %v111 = vld [vmem:[#allocation3 + $0xe4] sm:$0xf]
    %v112 = vld [vmem:[#allocation3 + $0xe8] sm:$0xf]
    %v113 = vld [vmem:[#allocation3 + $0xec] sm:$0xf]
    %v114 = vld [vmem:[#allocation3 + $0xf0] sm:$0xf]
    %v115 = vld [vmem:[#allocation3 + $0xf4] sm:$0xf]
    %v116 = vld [vmem:[#allocation3 + $0xf8] sm:$0xf]
    %v117 = vld [vmem:[#allocation3 + $0xfc] sm:$0xf]
    %v118 = vld [vmem:[#allocation3 + $0x100] sm:$0xf]
    %v119 = vld [vmem:[#allocation3 + $0x104] sm:$0xf]
    %v120 = vld [vmem:[#allocation3 + $0x108] sm:$0xf]
    %v121 = vld [vmem:[#allocation3 + $0x10c] sm:$0xf]
    %v122 = vld [vmem:[#allocation3 + $0x110] sm:$0xf]
    %v123 = vld [vmem:[#allocation3 + $0x114] sm:$0xf]
    %v124 = vld [vmem:[#allocation3 + $0x118] sm:$0xf]
    %v125 = vld [vmem:[#allocation3 + $0x11c] sm:$0xf]
    %v126 = vld [vmem:[#allocation3 + $0x120] sm:$0xf]
    %v127 = vld [vmem:[#allocation3 + $0x124] sm:$0xf]
    %v128 = vld [vmem:[#allocation3 + $0x128] sm:$0xf]
    %v129 = vld [vmem:[#allocation3 + $0x12c] sm:$0xf]
    %v130 = vld [vmem:[#allocation3 + $0x130] sm:$0xf]
    %v131 = vld [vmem:[#allocation3 + $0x134] sm:$0xf]
    %v132 = vld [vmem:[#allocation3 + $0x138] sm:$0xf]
    %v133 = vld [vmem:[#allocation3 + $0x13c] sm:$0xf]
    %v134 = vld [vmem:[#allocation3 + $0x140] sm:$0xf]
    %v135 = vld [vmem:[#allocation3 + $0x144] sm:$0xf]
    %v136 = vld [vmem:[#allocation3 + $0x148] sm:$0xf]
    %v137 = vld [vmem:[#allocation3 + $0x14c] sm:$0xf]
    %v138 = vld [vmem:[#allocation3 + $0x150] sm:$0xf]
    %v139 = vld [vmem:[#allocation3 + $0x154] sm:$0xf]
    %v140 = vld [vmem:[#allocation3 + $0x158] sm:$0xf]
    %v141 = vld [vmem:[#allocation3 + $0x15c] sm:$0xf]
    %v142 = vld [vmem:[#allocation3 + $0x160] sm:$0xf]
    %v143 = vld [vmem:[#allocation3 + $0x164] sm:$0xf]
    %v144 = vld [vmem:[#allocation3 + $0x168] sm:$0xf]
    %v145 = vld [vmem:[#allocation3 + $0x16c] sm:$0xf]
    %v146 = vld [vmem:[#allocation3 + $0x170] sm:$0xf]
    %v147 = vld [vmem:[#allocation3 + $0x174] sm:$0xf]
    %v148 = vld [vmem:[#allocation3 + $0x178] sm:$0xf]
    %v149 = vld [vmem:[#allocation3 + $0x17c] sm:$0xf]
    %v150 = vld [vmem:[#allocation3 + $0x180] sm:$0xf]
    %v151 = vld [vmem:[#allocation3 + $0x184] sm:$0xf]
    %v152 = vld [vmem:[#allocation3 + $0x188] sm:$0xf]
    %v153 = vld [vmem:[#allocation3 + $0x18c] sm:$0xf]
    %v154 = vld [vmem:[#allocation3 + $0x190] sm:$0xf]
    %v155 = vld [vmem:[#allocation3 + $0x194] sm:$0xf]
    %v156 = vld [vmem:[#allocation3 + $0x198] sm:$0xf]
    %v157 = vld [vmem:[#allocation3 + $0x19c] sm:$0xf]
    %v158 = vld [vmem:[#allocation3 + $0x1a0] sm:$0xf]
    %v159 = vld [vmem:[#allocation3 + $0x1a4] sm:$0xf]
    %v160 = vld [vmem:[#allocation3 + $0x1a8] sm:$0xf]
    %v161 = vld [vmem:[#allocation3 + $0x1ac] sm:$0xf]
    %v162 = vld [vmem:[#allocation3 + $0x1b0] sm:$0xf]
    %v163 = vld [vmem:[#allocation3 + $0x1b4] sm:$0xf]
    %v164 = vld [vmem:[#allocation3 + $0x1b8] sm:$0xf]
    %v165 = vld [vmem:[#allocation3 + $0x1bc] sm:$0xf]
    %v166 = vld [vmem:[#allocation3 + $0x1c0] sm:$0xf]
    %v167 = vld [vmem:[#allocation3 + $0x1c4] sm:$0xf]
    %v168 = vld [vmem:[#allocation3 + $0x1c8] sm:$0xf]
    %v169 = vld [vmem:[#allocation3 + $0x1cc] sm:$0xf]
    %v170 = vld [vmem:[#allocation3 + $0x1d0] sm:$0xf]
    %v171 = vld [vmem:[#allocation3 + $0x1d4] sm:$0xf]
    %v172 = vld [vmem:[#allocation3 + $0x1d8] sm:$0xf]
    %v173 = vld [vmem:[#allocation3 + $0x1dc] sm:$0xf]
    %v174 = vld [vmem:[#allocation3 + $0x1e0] sm:$0xf]
    %v175 = vld [vmem:[#allocation3 + $0x1e4] sm:$0xf]
    %v176 = vld [vmem:[#allocation3 + $0x1e8] sm:$0xf]
    %v177 = vld [vmem:[#allocation3 + $0x1ec] sm:$0xf]
    %v178 = vld [vmem:[#allocation3 + $0x1f0] sm:$0xf]
    %v179 = vld [vmem:[#allocation3 + $0x1f4] sm:$0xf]
    %v180 = vld [vmem:[#allocation3 + $0x1f8] sm:$0xf]
    %v181 = vld [vmem:[#allocation3 + $0x1fc] sm:$0xf]
    %v190 = vunpack.c.l.b16 %v46
    %v191 = vunpack.c.h.b16 %v46
    %v192 = vunpack.c.l.b16 %v47
    %v193 = vunpack.c.h.b16 %v47
    %v194 = vunpack.c.l.b16 %v48
    %v195 = vunpack.c.h.b16 %v48
    %v196 = vunpack.c.l.b16 %v49
    %v197 = vunpack.c.h.b16 %v49
    %v198 = vunpack.c.l.b16 %v50
    %v199 = vunpack.c.h.b16 %v50
    %v200 = vunpack.c.l.b16 %v51
    %v201 = vunpack.c.h.b16 %v51
    %v202 = vunpack.c.l.b16 %v52
    %v203 = vunpack.c.h.b16 %v52
    %v204 = vunpack.c.l.b16 %v53
    %v205 = vunpack.c.h.b16 %v53
    %v206 = vpack.c.b16 %v198, %v190
    %v207 = vpack.c.b16 %v199, %v191
    %v208 = vpack.c.b16 %v200, %v192
    %v209 = vpack.c.b16 %v201, %v193
    %v210 = vpack.c.b16 %v202, %v194
    %v211 = vpack.c.b16 %v203, %v195
    %v212 = vpack.c.b16 %v204, %v196
    %v213 = vpack.c.b16 %v205, %v197
    %v350 = vunpack.c.l.b16 %v54
    %v351 = vunpack.c.l.b16 %v55
    %v352 = vunpack.c.l.b16 %v56
    %v353 = vunpack.c.l.b16 %v57
    %v354 = vunpack.c.l.b16 %v58
    %v355 = vunpack.c.l.b16 %v59
    %v356 = vunpack.c.l.b16 %v60
    %v357 = vunpack.c.l.b16 %v61
    %v358 = vunpack.c.l.b16 %v62
    %v359 = vunpack.c.l.b16 %v63
    %v360 = vunpack.c.l.b16 %v64
    %v361 = vunpack.c.l.b16 %v65
    %v362 = vunpack.c.l.b16 %v66
    %v363 = vunpack.c.l.b16 %v67
    %v364 = vunpack.c.l.b16 %v68
    %v365 = vunpack.c.l.b16 %v69
    %v366 = vunpack.c.l.b16 %v70
    %v367 = vunpack.c.l.b16 %v71
    %v368 = vunpack.c.l.b16 %v72
    %v369 = vunpack.c.l.b16 %v73
    %v370 = vunpack.c.l.b16 %v74
    %v371 = vunpack.c.l.b16 %v75
    %v372 = vunpack.c.l.b16 %v76
    %v373 = vunpack.c.l.b16 %v77
    %v374 = vunpack.c.l.b16 %v78
    %v375 = vunpack.c.l.b16 %v79
    %v376 = vunpack.c.l.b16 %v80
    %v377 = vunpack.c.l.b16 %v81
    %v378 = vunpack.c.l.b16 %v82
    %v379 = vunpack.c.l.b16 %v83
    %v380 = vunpack.c.l.b16 %v84
    %v381 = vunpack.c.l.b16 %v85
    %v382 = vunpack.c.l.b16 %v86
    %v383 = vunpack.c.l.b16 %v87
    %v384 = vunpack.c.l.b16 %v88
    %v385 = vunpack.c.l.b16 %v89
    %v386 = vunpack.c.l.b16 %v90
    %v387 = vunpack.c.l.b16 %v91
    %v388 = vunpack.c.l.b16 %v92
    %v389 = vunpack.c.l.b16 %v93
    %v390 = vunpack.c.l.b16 %v94
    %v391 = vunpack.c.l.b16 %v95
    %v392 = vunpack.c.l.b16 %v96
    %v393 = vunpack.c.l.b16 %v97
    %v394 = vunpack.c.l.b16 %v98
    %v395 = vunpack.c.l.b16 %v99
    %v396 = vunpack.c.l.b16 %v100
    %v397 = vunpack.c.l.b16 %v101
    %v398 = vunpack.c.l.b16 %v102
    %v399 = vunpack.c.l.b16 %v103
    %v400 = vunpack.c.l.b16 %v104
    %v401 = vunpack.c.l.b16 %v105
    %v402 = vunpack.c.l.b16 %v106
    %v403 = vunpack.c.l.b16 %v107
    %v404 = vunpack.c.l.b16 %v108
    %v405 = vunpack.c.l.b16 %v109
    %v406 = vunpack.c.l.b16 %v110
    %v407 = vunpack.c.l.b16 %v111
    %v408 = vunpack.c.l.b16 %v112
    %v409 = vunpack.c.l.b16 %v113
    %v410 = vunpack.c.l.b16 %v114
    %v411 = vunpack.c.l.b16 %v115
    %v412 = vunpack.c.l.b16 %v116
    %v413 = vunpack.c.l.b16 %v117
    %v414 = vunpack.c.l.b16 %v118
    %v415 = vunpack.c.l.b16 %v119
    %v416 = vunpack.c.l.b16 %v120
    %v417 = vunpack.c.l.b16 %v121
    %v418 = vunpack.c.l.b16 %v122
    %v419 = vunpack.c.l.b16 %v123
    %v420 = vunpack.c.l.b16 %v124
    %v421 = vunpack.c.l.b16 %v125
    %v422 = vunpack.c.l.b16 %v126
    %v423 = vunpack.c.l.b16 %v127
    %v424 = vunpack.c.l.b16 %v128
    %v425 = vunpack.c.l.b16 %v129
    %v426 = vunpack.c.l.b16 %v130
    %v427 = vunpack.c.l.b16 %v131
    %v428 = vunpack.c.l.b16 %v132
    %v429 = vunpack.c.l.b16 %v133
    %v430 = vunpack.c.l.b16 %v134
    %v431 = vunpack.c.l.b16 %v135
    %v432 = vunpack.c.l.b16 %v136
    %v433 = vunpack.c.l.b16 %v137
    %v434 = vunpack.c.l.b16 %v138
    %v435 = vunpack.c.l.b16 %v139
    %v436 = vunpack.c.l.b16 %v140
    %v437 = vunpack.c.l.b16 %v141
    %v438 = vunpack.c.l.b16 %v142
    %v439 = vunpack.c.l.b16 %v143
    %v440 = vunpack.c.l.b16 %v144
    %v441 = vunpack.c.l.b16 %v145
    %v442 = vunpack.c.l.b16 %v146
    %v443 = vunpack.c.l.b16 %v147
    %v444 = vunpack.c.l.b16 %v148
    %v445 = vunpack.c.l.b16 %v149
    %v446 = vunpack.c.l.b16 %v150
    %v447 = vunpack.c.l.b16 %v151
    %v448 = vunpack.c.l.b16 %v152
    %v449 = vunpack.c.l.b16 %v153
    %v450 = vunpack.c.l.b16 %v154
    %v451 = vunpack.c.l.b16 %v155
    %v452 = vunpack.c.l.b16 %v156
    %v453 = vunpack.c.l.b16 %v157
    %v454 = vunpack.c.l.b16 %v158
    %v455 = vunpack.c.l.b16 %v159
    %v456 = vunpack.c.l.b16 %v160
    %v457 = vunpack.c.l.b16 %v161
    %v458 = vunpack.c.l.b16 %v162
    %v459 = vunpack.c.l.b16 %v163
    %v460 = vunpack.c.l.b16 %v164
    %v461 = vunpack.c.l.b16 %v165
    %v462 = vunpack.c.l.b16 %v166
    %v463 = vunpack.c.l.b16 %v167
    %v464 = vunpack.c.l.b16 %v168
    %v465 = vunpack.c.l.b16 %v169
    %v466 = vunpack.c.l.b16 %v170
    %v467 = vunpack.c.l.b16 %v171
    %v468 = vunpack.c.l.b16 %v172
    %v469 = vunpack.c.l.b16 %v173
    %v470 = vunpack.c.l.b16 %v174
    %v471 = vunpack.c.l.b16 %v175
    %v472 = vunpack.c.l.b16 %v176
    %v473 = vunpack.c.l.b16 %v177
    %v474 = vunpack.c.l.b16 %v178
    %v475 = vunpack.c.l.b16 %v179
    %v476 = vunpack.c.l.b16 %v180
    %v477 = vunpack.c.l.b16 %v181
    %v478 = vpack.c.b16 %v351, %v350
    %v479 = vpack.c.b16 %v353, %v352
    %v480 = vpack.c.b16 %v355, %v354
    %v481 = vpack.c.b16 %v357, %v356
    %v482 = vpack.c.b16 %v359, %v358
    %v483 = vpack.c.b16 %v361, %v360
    %v484 = vpack.c.b16 %v363, %v362
    %v485 = vpack.c.b16 %v365, %v364
    %v486 = vpack.c.b16 %v367, %v366
    %v487 = vpack.c.b16 %v369, %v368
    %v488 = vpack.c.b16 %v371, %v370
    %v489 = vpack.c.b16 %v373, %v372
    %v490 = vpack.c.b16 %v375, %v374
    %v491 = vpack.c.b16 %v377, %v376
    %v492 = vpack.c.b16 %v379, %v378
    %v493 = vpack.c.b16 %v381, %v380
    %v494 = vpack.c.b16 %v383, %v382
    %v495 = vpack.c.b16 %v385, %v384
    %v496 = vpack.c.b16 %v387, %v386
    %v497 = vpack.c.b16 %v389, %v388
    %v498 = vpack.c.b16 %v391, %v390
    %v499 = vpack.c.b16 %v393, %v392
    %v500 = vpack.c.b16 %v395, %v394
    %v501 = vpack.c.b16 %v397, %v396
    %v502 = vpack.c.b16 %v399, %v398
    %v503 = vpack.c.b16 %v401, %v400
    %v504 = vpack.c.b16 %v403, %v402
    %v505 = vpack.c.b16 %v405, %v404
    %v506 = vpack.c.b16 %v407, %v406
    %v507 = vpack.c.b16 %v409, %v408
    %v508 = vpack.c.b16 %v411, %v410
    %v509 = vpack.c.b16 %v413, %v412
    %v510 = vpack.c.b16 %v415, %v414
    %v511 = vpack.c.b16 %v417, %v416
    %v512 = vpack.c.b16 %v419, %v418
    %v513 = vpack.c.b16 %v421, %v420
    %v514 = vpack.c.b16 %v423, %v422
    %v515 = vpack.c.b16 %v425, %v424
    %v516 = vpack.c.b16 %v427, %v426
    %v517 = vpack.c.b16 %v429, %v428
    %v518 = vpack.c.b16 %v431, %v430
    %v519 = vpack.c.b16 %v433, %v432
    %v520 = vpack.c.b16 %v435, %v434
    %v521 = vpack.c.b16 %v437, %v436
    %v522 = vpack.c.b16 %v439, %v438
    %v523 = vpack.c.b16 %v441, %v440
    %v524 = vpack.c.b16 %v443, %v442
    %v525 = vpack.c.b16 %v445, %v444
    %v526 = vpack.c.b16 %v447, %v446
    %v527 = vpack.c.b16 %v449, %v448
    %v528 = vpack.c.b16 %v451, %v450
    %v529 = vpack.c.b16 %v453, %v452
    %v530 = vpack.c.b16 %v455, %v454
    %v531 = vpack.c.b16 %v457, %v456
    %v532 = vpack.c.b16 %v459, %v458
    %v533 = vpack.c.b16 %v461, %v460
    %v534 = vpack.c.b16 %v463, %v462
    %v535 = vpack.c.b16 %v465, %v464
    %v536 = vpack.c.b16 %v467, %v466
    %v537 = vpack.c.b16 %v469, %v468
    %v538 = vpack.c.b16 %v471, %v470
    %v539 = vpack.c.b16 %v473, %v472
    %v540 = vpack.c.b16 %v475, %v474
    %v541 = vpack.c.b16 %v477, %v476
    %606 = vmatprep.subr.bf16.mxu0 0
    %607 = vmatpush1.bf16.msra.mxu0 %v478
    %608 = vmatprep.subr.bf16.mxu0 0
    %609 = vmatpush1.bf16.msra.mxu0 %v479
    %610 = vmatprep.subr.bf16.mxu0 0
    %611 = vmatpush1.bf16.msra.mxu0 %v480
    %612 = vmatprep.subr.bf16.mxu0 0
    %613 = vmatpush1.bf16.msra.mxu0 %v481
    %614 = vmatprep.subr.bf16.mxu0 0
    %615 = vmatpush1.bf16.msra.mxu0 %v482
    %616 = vmatprep.subr.bf16.mxu0 0
    %617 = vmatpush1.bf16.msra.mxu0 %v483
    %618 = vmatprep.subr.bf16.mxu0 0
    %619 = vmatpush1.bf16.msra.mxu0 %v484
    %620 = vmatprep.subr.bf16.mxu0 0
    %621 = vmatpush1.bf16.msra.mxu0 %v485
    %622 = vmatprep.subr.bf16.mxu0 0
    %623 = vmatpush1.bf16.msra.mxu0 %v486
    %624 = vmatprep.subr.bf16.mxu0 0
    %625 = vmatpush1.bf16.msra.mxu0 %v487
    %626 = vmatprep.subr.bf16.mxu0 0
    %627 = vmatpush1.bf16.msra.mxu0 %v488
    %628 = vmatprep.subr.bf16.mxu0 0
    %629 = vmatpush1.bf16.msra.mxu0 %v489
    %630 = vmatprep.subr.bf16.mxu0 0
    %631 = vmatpush1.bf16.msra.mxu0 %v490
    %632 = vmatprep.subr.bf16.mxu0 0
    %633 = vmatpush1.bf16.msra.mxu0 %v491
    %634 = vmatprep.subr.bf16.mxu0 0
    %635 = vmatpush1.bf16.msra.mxu0 %v492
    %636 = vmatprep.subr.bf16.mxu0 0
    %637 = vmatpush1.bf16.msra.mxu0 %v493
    %638 = vmatprep.mubr.bf16.mxu0 %v207
    %639 = vmatmul.mubr.bf16.gmra.mrb[0].mxu0 %v206
    %v640 = vpop.f32.mrb[0].mxu0
    %v641 = vadd.f32 0.0, %v640
    %v642 = vpop.f32.mrb[0].mxu0
    %v643 = vpop.f32.mrb[0].mxu0
    %v644 = vadd.f32 0.0, %v643
    %v645 = vpop.f32.mrb[0].mxu0
    %646 = vdwg.mxu0
    %647 = vmatprep.subr.bf16.mxu0 0
    %648 = vmatpush1.bf16.msra.mxu0 %v494
    %649 = vmatprep.subr.bf16.mxu0 0
    %650 = vmatpush1.bf16.msra.mxu0 %v495
    %651 = vmatprep.subr.bf16.mxu0 0
    %652 = vmatpush1.bf16.msra.mxu0 %v496
    %653 = vmatprep.subr.bf16.mxu0 0
    %654 = vmatpush1.bf16.msra.mxu0 %v497
    %655 = vmatprep.subr.bf16.mxu0 0
    %656 = vmatpush1.bf16.msra.mxu0 %v498
    %657 = vmatprep.subr.bf16.mxu0 0
    %658 = vmatpush1.bf16.msra.mxu0 %v499
    %659 = vmatprep.subr.bf16.mxu0 0
    %660 = vmatpush1.bf16.msra.mxu0 %v500
    %661 = vmatprep.subr.bf16.mxu0 0
    %662 = vmatpush1.bf16.msra.mxu0 %v501
    %663 = vmatprep.subr.bf16.mxu0 0
    %664 = vmatpush1.bf16.msra.mxu0 %v502
    %665 = vmatprep.subr.bf16.mxu0 0
    %666 = vmatpush1.bf16.msra.mxu0 %v503
    %667 = vmatprep.subr.bf16.mxu0 0
    %668 = vmatpush1.bf16.msra.mxu0 %v504
    %669 = vmatprep.subr.bf16.mxu0 0
    %670 = vmatpush1.bf16.msra.mxu0 %v505
    %671 = vmatprep.subr.bf16.mxu0 0
    %672 = vmatpush1.bf16.msra.mxu0 %v506
    %673 = vmatprep.subr.bf16.mxu0 0
    %674 = vmatpush1.bf16.msra.mxu0 %v507
    %675 = vmatprep.subr.bf16.mxu0 0
    %676 = vmatpush1.bf16.msra.mxu0 %v508
    %677 = vmatprep.subr.bf16.mxu0 0
    %678 = vmatpush1.bf16.msra.mxu0 %v509
    %679 = vmatprep.mubr.bf16.mxu0 %v209
    %680 = vmatmul.mubr.bf16.gmra.mrb[0].mxu0 %v208
    %v681 = vpop.f32.mrb[0].mxu0
    %v682 = vadd.f32 %v641, %v681
    %v683 = vpop.f32.mrb[0].mxu0
    %v684 = vpop.f32.mrb[0].mxu0
    %v685 = vadd.f32 %v644, %v684
    %v686 = vpop.f32.mrb[0].mxu0
    %687 = vdwg.mxu0
    %688 = vmatprep.subr.bf16.mxu0 0
    %689 = vmatpush1.bf16.msra.mxu0 %v510
    %690 = vmatprep.subr.bf16.mxu0 0
    %691 = vmatpush1.bf16.msra.mxu0 %v511
    %692 = vmatprep.subr.bf16.mxu0 0
    %693 = vmatpush1.bf16.msra.mxu0 %v512
    %694 = vmatprep.subr.bf16.mxu0 0
    %695 = vmatpush1.bf16.msra.mxu0 %v513
    %696 = vmatprep.subr.bf16.mxu0 0
    %697 = vmatpush1.bf16.msra.mxu0 %v514
    %698 = vmatprep.subr.bf16.mxu0 0
    %699 = vmatpush1.bf16.msra.mxu0 %v515
    %700 = vmatprep.subr.bf16.mxu0 0
    %701 = vmatpush1.bf16.msra.mxu0 %v516
    %702 = vmatprep.subr.bf16.mxu0 0
    %703 = vmatpush1.bf16.msra.mxu0 %v517
    %704 = vmatprep.subr.bf16.mxu0 0
    %705 = vmatpush1.bf16.msra.mxu0 %v518
    %706 = vmatprep.subr.bf16.mxu0 0
    %707 = vmatpush1.bf16.msra.mxu0 %v519
    %708 = vmatprep.subr.bf16.mxu0 0
    %709 = vmatpush1.bf16.msra.mxu0 %v520
    %710 = vmatprep.subr.bf16.mxu0 0
    %711 = vmatpush1.bf16.msra.mxu0 %v521
    %712 = vmatprep.subr.bf16.mxu0 0
    %713 = vmatpush1.bf16.msra.mxu0 %v522
    %714 = vmatprep.subr.bf16.mxu0 0
    %715 = vmatpush1.bf16.msra.mxu0 %v523
    %716 = vmatprep.subr.bf16.mxu0 0
    %717 = vmatpush1.bf16.msra.mxu0 %v524
    %718 = vmatprep.subr.bf16.mxu0 0
    %719 = vmatpush1.bf16.msra.mxu0 %v525
    %720 = vmatprep.mubr.bf16.mxu0 %v211
    %721 = vmatmul.mubr.bf16.gmra.mrb[0].mxu0 %v210
    %v722 = vpop.f32.mrb[0].mxu0
    %v723 = vadd.f32 %v682, %v722
    %v724 = vpop.f32.mrb[0].mxu0
    %v725 = vpop.f32.mrb[0].mxu0
    %v726 = vadd.f32 %v685, %v725
    %v727 = vpop.f32.mrb[0].mxu0
    %728 = vdwg.mxu0
    %729 = vmatprep.subr.bf16.mxu0 0
    %730 = vmatpush1.bf16.msra.mxu0 %v526
    %731 = vmatprep.subr.bf16.mxu0 0
    %732 = vmatpush1.bf16.msra.mxu0 %v527
    %733 = vmatprep.subr.bf16.mxu0 0
    %734 = vmatpush1.bf16.msra.mxu0 %v528
    %735 = vmatprep.subr.bf16.mxu0 0
    %736 = vmatpush1.bf16.msra.mxu0 %v529
    %737 = vmatprep.subr.bf16.mxu0 0
    %738 = vmatpush1.bf16.msra.mxu0 %v530
    %739 = vmatprep.subr.bf16.mxu0 0
    %740 = vmatpush1.bf16.msra.mxu0 %v531
    %741 = vmatprep.subr.bf16.mxu0 0
    %742 = vmatpush1.bf16.msra.mxu0 %v532
    %743 = vmatprep.subr.bf16.mxu0 0
    %744 = vmatpush1.bf16.msra.mxu0 %v533
    %745 = vmatprep.subr.bf16.mxu0 0
    %746 = vmatpush1.bf16.msra.mxu0 %v534
    %747 = vmatprep.subr.bf16.mxu0 0
    %748 = vmatpush1.bf16.msra.mxu0 %v535
    %749 = vmatprep.subr.bf16.mxu0 0
    %750 = vmatpush1.bf16.msra.mxu0 %v536
    %751 = vmatprep.subr.bf16.mxu0 0
    %752 = vmatpush1.bf16.msra.mxu0 %v537
    %753 = vmatprep.subr.bf16.mxu0 0
    %754 = vmatpush1.bf16.msra.mxu0 %v538
    %755 = vmatprep.subr.bf16.mxu0 0
    %756 = vmatpush1.bf16.msra.mxu0 %v539
    %757 = vmatprep.subr.bf16.mxu0 0
    %758 = vmatpush1.bf16.msra.mxu0 %v540
    %759 = vmatprep.subr.bf16.mxu0 0
    %760 = vmatpush1.bf16.msra.mxu0 %v541
    %761 = vmatprep.mubr.bf16.mxu0 %v213
    %762 = vmatmul.mubr.bf16.gmra.mrb[0].mxu0 %v212
    %v763 = vpop.f32.mrb[0].mxu0
    %v764 = vadd.f32 %v723, %v763
    %v765 = vpop.f32.mrb[0].mxu0
    %v766 = vpop.f32.mrb[0].mxu0
    %v767 = vadd.f32 %v726, %v766
    %v768 = vpop.f32.mrb[0].mxu0
    %769 = vdwg.mxu0
    %v770 = vadd.f32 %v44, %v764
    %v771 = vadd.f32 %v45, %v767
    %772 = vst [vmem:[#allocation2] sm:$0xff] %v770
    %773 = vst [vmem:[#allocation2 + $0x8] sm:$0xff] %v771
    // Predicated region
    $region34: #{_lambda_.1} parent=1 // pred_check
      %p774 = pneg %p38
    $region35: #{_lambda_.1} parent=1 // pred_check_branch
      %776 = sbr.rel (%p774) target = $region37
    $region36: #{_lambda_.1} parent=1 // pred_region
      %v777 = vld [vmem:[#allocation2] sm:$0xff]
      %v778 = vld [vmem:[#allocation2 + $0x8] sm:$0xff]
      %v779 = vadd.f32 %v777, %v778
      %v780 = vrot.slane %v779, 4
      %v781 = vadd.f32 %v779, %v780
      %v782 = vrot.slane %v781, 2
      %v783 = vadd.f32 %v781, %v782
      %v784 = vrot.slane %v783, 1
      %v785 = vadd.f32 %v783, %v784
      %v786 = vmul.f32 %v785, 0.5
      %v787 = vmul.f32 %v777, %v777
      %v788 = vmul.f32 %v778, %v778
      %v789 = vadd.f32 %v787, %v788
      %v790 = vrot.slane %v789, 4
      %v791 = vadd.f32 %v789, %v790
      %v792 = vrot.slane %v791, 2
      %v793 = vadd.f32 %v791, %v792
      %v794 = vrot.slane %v793, 1
      %v795 = vadd.f32 %v793, %v794
      %v796 = vmul.f32 %v795, 0.5
      %v797 = vmul.f32 %v786, %v786
      %v798 = vsub.f32 %v796, %v797
      %v799 = vld [vmem:[%s2] sm:$0x1]
      %v800 = vadd.f32 %v798, 1e-05
      %v801 = vrsqrt.pop %v800
      %v802 = vmul.f32 %v799, %v801
      %v803 = vld [vmem:[%s3] sm:$0x1]
      %v804 = vmul.f32 %v786, %v802
      %v805 = vsub.f32 %v803, %v804
      %v807 = vlaneseq
      %v808 = vshrl.u32 %v807, 7
      %v809 = vsub.s32 0, %v808
      %v810 = vrot.slane %v802, %v809
      %v812 = vmul.f32 %v777, %v810
      %v813 = vmul.f32 %v778, %v810
      %v815 = vlaneseq
      %v816 = vshrl.u32 %v815, 7
      %v817 = vsub.s32 0, %v816
      %v818 = vrot.slane %v805, %v817
      %v820 = vadd.f32 %v812, %v818
      %v821 = vadd.f32 %v813, %v818
      %v822 = vmax.f32 %v820, 0.0
      %v823 = vmax.f32 %v821, 0.0
      %v824 = vpack.c.bf16 %v823, %v822
      %v825 = vld [vmem:[%s4] sm:$0xf]
      %v826 = vld [vmem:[%s4 + $0x4] sm:$0xf]
      %v827 = vld [vmem:[%s4 + $0x8] sm:$0xf]
      %v828 = vld [vmem:[%s4 + $0xc] sm:$0xf]
      %v829 = vld [vmem:[%s4 + $0x10] sm:$0xf]
      %v830 = vld [vmem:[%s4 + $0x14] sm:$0xf]
      %v831 = vld [vmem:[%s4 + $0x18] sm:$0xf]
      %v832 = vld [vmem:[%s4 + $0x1c] sm:$0xf]
      %v833 = vld [vmem:[%s4 + $0x20] sm:$0xf]
      %v834 = vld [vmem:[%s4 + $0x24] sm:$0xf]
      %v835 = vld [vmem:[%s4 + $0x28] sm:$0xf]
      %v836 = vld [vmem:[%s4 + $0x2c] sm:$0xf]
      %v837 = vld [vmem:[%s4 + $0x30] sm:$0xf]
      %v838 = vld [vmem:[%s4 + $0x34] sm:$0xf]
      %v839 = vld [vmem:[%s4 + $0x38] sm:$0xf]
      %v840 = vld [vmem:[%s4 + $0x3c] sm:$0xf]
      %v841 = vld [vmem:[%s5] sm:$0x1]
      %v843 = vlaneseq
      %v844 = vshrl.u32 %v843, 7
      %v845 = vsub.s32 0, %v844
      %v846 = vrot.slane %v841, %v845
      %v864 = vunpack.c.l.b16 %v825
      %v865 = vunpack.c.l.b16 %v826
      %v866 = vunpack.c.l.b16 %v827
      %v867 = vunpack.c.l.b16 %v828
      %v868 = vunpack.c.l.b16 %v829
      %v869 = vunpack.c.l.b16 %v830
      %v870 = vunpack.c.l.b16 %v831
      %v871 = vunpack.c.l.b16 %v832
      %v872 = vunpack.c.l.b16 %v833
      %v873 = vunpack.c.l.b16 %v834
      %v874 = vunpack.c.l.b16 %v835
      %v875 = vunpack.c.l.b16 %v836
      %v876 = vunpack.c.l.b16 %v837
      %v877 = vunpack.c.l.b16 %v838
      %v878 = vunpack.c.l.b16 %v839
      %v879 = vunpack.c.l.b16 %v840
      %v880 = vpack.c.b16 %v865, %v864
      %v881 = vpack.c.b16 %v867, %v866
      %v882 = vpack.c.b16 %v869, %v868
      %v883 = vpack.c.b16 %v871, %v870
      %v884 = vpack.c.b16 %v873, %v872
      %v885 = vpack.c.b16 %v875, %v874
      %v886 = vpack.c.b16 %v877, %v876
      %v887 = vpack.c.b16 %v879, %v878
      %896 = vmatprep.subr.bf16.mxu0 0
      %897 = vmatpush1.bf16.msra.mxu0 %v880
      %898 = vmatprep.subr.bf16.mxu0 0
      %899 = vmatpush1.bf16.msra.mxu0 %v881
      %900 = vmatprep.subr.bf16.mxu0 0
      %901 = vmatpush1.bf16.msra.mxu0 %v882
      %902 = vmatprep.subr.bf16.mxu0 0
      %903 = vmatpush1.bf16.msra.mxu0 %v883
      %904 = vmatprep.subr.bf16.mxu0 0
      %905 = vmatpush1.bf16.msra.mxu0 %v884
      %906 = vmatprep.subr.bf16.mxu0 0
      %907 = vmatpush1.bf16.msra.mxu0 %v885
      %908 = vmatprep.subr.bf16.mxu0 0
      %909 = vmatpush1.bf16.msra.mxu0 %v886
      %910 = vmatprep.subr.bf16.mxu0 0
      %911 = vmatpush1.bf16.msra.mxu0 %v887
      %912 = vmatprep.subr.bf16.mxu0 0
      %913 = vmatpush1.bf16.msra.mxu0 0
      %914 = vmatprep.subr.bf16.mxu0 0
      %915 = vmatpush1.bf16.msra.mxu0 0
      %916 = vmatprep.subr.bf16.mxu0 0
      %917 = vmatpush1.bf16.msra.mxu0 0
      %918 = vmatprep.subr.bf16.mxu0 0
      %919 = vmatpush1.bf16.msra.mxu0 0
      %920 = vmatprep.subr.bf16.mxu0 0
      %921 = vmatpush1.bf16.msra.mxu0 0
      %922 = vmatprep.subr.bf16.mxu0 0
      %923 = vmatpush1.bf16.msra.mxu0 0
      %924 = vmatprep.subr.bf16.mxu0 0
      %925 = vmatpush1.bf16.msra.mxu0 0
      %926 = vmatprep.subr.bf16.mxu0 0
      %927 = vmatpush1.bf16.msra.mxu0 0
      %928 = vmatprep.mubr.bf16.mxu0 0
      %929 = vmatmul.mubr.bf16.gmra.mrb[0].mxu0 %v824
      %v930 = vpop.f32.mrb[0].mxu0
      %v931 = vadd.f32 %v846, %v930
      %v932 = vpop.f32.mrb[0].mxu0
      %v933 = vpop.f32.mrb[0].mxu0
      %v934 = vadd.f32 %v846, %v933
      %v935 = vpop.f32.mrb[0].mxu0
      %936 = vdwg.mxu0
      %937 = vst [vmem:[%s6] sm:$0xff] %v931
      %938 = vst [vmem:[%s6 + $0x8] sm:$0xff] %v934
    $region37: #{_lambda_.1} parent=1 // pred_fallthru
      _
    // Predicated region
    $region38: #{_lambda_.1} parent=1 // pred_check
      _
    $region39: #{_lambda_.1} parent=1 // pred_check_branch
      %940 = sbr.rel (0) target = $region41
    $region40: #{_lambda_.1} parent=1 // pred_region
      _
    $region41: #{_lambda_.1} parent=1 // pred_fallthru
      _
    // Predicated region
    $region42: #{_lambda_.1} parent=1 // pred_check
      _
    $region43: #{_lambda_.1} parent=1 // pred_check_branch
      %942 = sbr.rel (0) target = $region45
    $region44: #{_lambda_.1} parent=1 // pred_region
      _
    $region45: #{_lambda_.1} parent=1 // pred_fallthru
      _
    %943 = vsyncpa [#allocation4], 1

</llo_original>
